<compile_context>
chip_gen: v5e
topology: v5e:2x2
jax: 0.10.0
libtpu: 0.0.40
codegen_flags: <defaults>
</compile_context>

<pallas_src>
import functools

import jax
import jax.numpy as jnp
from jax.experimental import pallas as pl
from jax.experimental.pallas import tpu as pltpu

LANES = 128


def _round_up(x, m):
    return ((x + m - 1) // m) * m


def _tensorcores_per_chip():
    """2 on TPU v7x (two TensorCores per chip); 1 on v5e/v6e (single TC)."""
    try:
        kind = jax.devices()[0].device_kind.lower()
    except Exception:
        return 1
    return 2 if ("7x" in kind or "v7" in kind) else 1


def _combined_loss_kernel(x_ref, t_ref, out_ref, *,
                          beta, half_inv_beta, half_beta,
                          tr, inner, num_slices, valid_rows, needs_mask):
    """Accumulates [sum(d^2), sum(|d|), sum(smooth_l1(d))] into the resident block."""
    if num_slices == 1:
        p = 0
        i = pl.program_id(0)          # reduction axis
    else:
        p = pl.program_id(0)          # core / slice axis (parallel)
        i = pl.program_id(1)          # reduction axis (innermost, arbitrary)

    @pl.when(i == 0)
    def _():
        out_ref[...] = jnp.zeros_like(out_ref)

    x = x_ref[...].astype(jnp.float32)
    t = t_ref[...].astype(jnp.float32)

    if needs_mask:
        # Grid over-covers the (rows, 128) view: rows past the true extent hold
        # garbage (OOB block region).  Zero them before any arithmetic so no
        # NaN/Inf can leak in.  Compiled in only when the grid over-covers.
        row0 = (p * inner + i) * tr
        row_ids = jax.lax.broadcasted_iota(jnp.int32, (tr, LANES), 0) + row0
        valid = row_ids < valid_rows
        zero = jnp.zeros_like(x)
        x = jnp.where(valid, x, zero)
        t = jnp.where(valid, t, zero)

    d = x - t
    sq = d * d
    ab = jnp.abs(d)
    # SmoothL1(beta): 0.5*d^2/beta if |d| < beta else |d| - 0.5*beta   (beta > 0)
    sl1 = jnp.where(ab < beta, half_inv_beta * sq, ab - half_beta)

    # Per-vreg partial sums: the reshape is (8,128)-tile aligned (no data
    # movement) and the axis-0 reduce is plain VPU vreg adds -- no per-step
    # XLU cross-lane reduction, no scalar round-trip.
    sq_p = sq.reshape(-1, 8, LANES).sum(axis=0)
    ab_p = ab.reshape(-1, 8, LANES).sum(axis=0)
    sl_p = sl1.reshape(-1, 8, LANES).sum(axis=0)

    if num_slices == 1:
        out_ref[0, :, :] += sq_p
        out_ref[1, :, :] += ab_p
        out_ref[2, :, :] += sl_p
    else:
        out_ref[0, 0, :, :] += sq_p
        out_ref[0, 1, :, :] += ab_p
        out_ref[0, 2, :, :] += sl_p


def combined_loss(inputs, targets, weights=(1.0 / 3, 1.0 / 3, 1.0 / 3), beta=1.0,
                  tile_rows=4096, num_slices=None):
    """Pallas implementation of CombinedLoss([MSE, L1, SmoothL1(beta)], weights)."""
    assert inputs.shape == targets.shape
    assert len(weights) == 3
    assert beta > 0.0, "pad/mask neutrality requires beta > 0"
    n_elems = int(inputs.size)

    itemsize = jnp.dtype(inputs.dtype).itemsize
    sub = max(8, 32 // itemsize)                           # packed-sublane multiple
    tile_rows = int(tile_rows) * max(1, 4 // itemsize)     # same VMEM footprint for narrow dtypes

    if num_slices is None:
        num_slices = _tensorcores_per_chip()

    # ---- lane-dense (rows, 128) view; pad only if flat size % 128 != 0 ------
    x = inputs.reshape(-1)
    t = targets.reshape(-1)
    n128 = _round_up(n_elems, LANES)
    if n128 != n_elems:
        # TODO(synk): lane-misaligned flat sizes still pay one pad copy; a 1-D
        # block kernel with element-level masking would remove it entirely.
        x = jnp.pad(x, (0, n128 - n_elems))
        t = jnp.pad(t, (0, n128 - n_elems))
    rows = n128 // LANES
    x2d = x.reshape(rows, LANES)
    t2d = t.reshape(rows, LANES)

    # ---- tiling --------------------------------------------------------------
    if rows < num_slices * sub:                 # too small to split across cores
        num_slices = 1
    rows_per_slice = -(-rows // num_slices)
    tr = max(sub, min(tile_rows, _round_up(rows_per_slice, sub)))
    tr = _round_up(tr, sub)
    total_blocks = -(-rows // tr)               # blocks containing >= 1 valid row
    inner = -(-total_blocks // num_slices)
    needs_mask = (num_slices * inner * tr) != rows
    last_block = total_blocks - 1

    kernel = functools.partial(
        _combined_loss_kernel,
        beta=float(beta),
        half_inv_beta=float(0.5 / beta),
        half_beta=float(0.5 * beta),
        tr=tr, inner=inner, num_slices=num_slices,
        valid_rows=rows, needs_mask=needs_mask,
    )

    block_bytes = tr * LANES * itemsize
    vmem_limit = int(min(64 << 20, max(32 << 20, 6 * block_bytes + (2 << 20))))
    cost = pl.CostEstimate(
        flops=10 * rows * LANES,
        transcendentals=0,
        bytes_accessed=2 * rows * LANES * itemsize + num_slices * 3 * 8 * LANES * 4,
    )

    if num_slices == 1:
        grid = (inner,)
        in_spec = pl.BlockSpec((tr, LANES), lambda i: (i, 0))
        out_spec = pl.BlockSpec((3, 8, LANES), lambda i: (0, 0, 0))
        out_shape = jax.ShapeDtypeStruct((3, 8, LANES), jnp.float32)
        sem_options = [("arbitrary",)]
    else:
        grid = (num_slices, inner)
        # Clamp so a slice never issues a DMA whose start is past the array;
        # any duplicated block contributes zero through the in-kernel row mask.
        in_spec = pl.BlockSpec(
            (tr, LANES), lambda p, i: (jnp.minimum(p * inner + i, last_block), 0))
        out_spec = pl.BlockSpec((1, 3, 8, LANES), lambda p, i: (p, 0, 0, 0))
        out_shape = jax.ShapeDtypeStruct((num_slices, 3, 8, LANES), jnp.float32)
        # Real 2-TensorCore sharding on v7x; fall back if lowering rejects it.
        sem_options = [(pltpu.CORE_PARALLEL, pltpu.ARBITRARY),
                       ("parallel", "arbitrary")]

    def build(dim_sem):
        return pl.pallas_call(
            kernel,
            out_shape=out_shape,
            grid_spec=pltpu.PrefetchScalarGridSpec(
                num_scalar_prefetch=0,
                grid=grid,
                in_specs=[in_spec, in_spec],
                out_specs=out_spec,
            ),
            compiler_params=pltpu.CompilerParams(
                dimension_semantics=dim_sem,
                vmem_limit_bytes=vmem_limit),
            cost_estimate=cost,
        )

    partials, err = None, None
    for sem in sem_options:
        try:
            out = build(sem)(x2d, t2d)
            if hasattr(out, "block_until_ready"):
                out.block_until_ready()     # surface compile/run errors inside the try
            partials = out
            break
        except Exception as e:              # e.g. CORE_PARALLEL unsupported here
            err = e
    if partials is None:
        raise err

    # Tiny final reduce + weighting on the XLA side.
    if num_slices == 1:
        totals = jnp.sum(partials, axis=(1, 2))        # (3,): [sum d^2, sum |d|, sum sl1]
    else:
        totals = jnp.sum(partials, axis=(0, 2, 3))     # (3,)
    w = jnp.asarray(weights, dtype=jnp.float32)
    return jnp.dot(w, totals) / jnp.float32(n_elems)


def combined_loss_ref(inputs, targets, weights=(1.0 / 3, 1.0 / 3, 1.0 / 3), beta=1.0):
    x = inputs.astype(jnp.float32)
    t = targets.astype(jnp.float32)
    d = x - t
    ab = jnp.abs(d)
    mse = jnp.mean(d * d)
    mae = jnp.mean(ab)
    smo = jnp.mean(jnp.where(ab < beta, 0.5 * d * d / beta, ab - 0.5 * beta))
    return weights[0] * mse + weights[1] * mae + weights[2] * smo


if __name__ == "__main__":
    key = jax.random.PRNGKey(0)
    k1, k2, k3, k4, k5, k6 = jax.random.split(key, 6)

    # 1) NCHW f32, lane-aligned: batch=2, channels=4, spatial=16 -> 2048 elems.
    x = jax.random.normal(k1, (2, 4, 16, 16), dtype=jnp.float32)
    t = jax.random.normal(k2, (2, 4, 16, 16), dtype=jnp.float32)
    loss = jax.block_until_ready(combined_loss(x, t))
    ref = combined_loss_ref(x, t)
    assert jnp.allclose(loss, ref, rtol=1e-5, atol=1e-5), (loss, ref)

    # 2) NCHW f32, NOT a multiple of 128 (exercises lane pad + in-kernel row mask).
    x2 = jax.random.normal(k3, (2, 3, 15, 17), dtype=jnp.float32)
    t2 = jax.random.normal(k4, (2, 3, 15, 17), dtype=jnp.float32)
    loss2 = jax.block_until_ready(combined_loss(x2, t2))
    ref2 = combined_loss_ref(x2, t2)
    assert jnp.allclose(loss2, ref2, rtol=1e-5, atol=1e-5), (loss2, ref2)

    # 3) bf16 inputs streamed at native width (full (16,128) tiles, f32 math).
    xb = x.astype(jnp.bfloat16)
    tb = t.astype(jnp.bfloat16)
    loss3 = jax.block_until_ready(combined_loss(xb, tb))
    ref3 = combined_loss_ref(xb, tb)
    assert jnp.allclose(loss3, ref3, rtol=1e-4, atol=1e-4), (loss3, ref3)

    # 4) multi-step accumulation + ragged-row mask (tiny tile forces inner > 1).
    x4 = jax.random.normal(k5, (2, 4, 40, 40), dtype=jnp.float32)   # 12800 -> 100 rows
    t4 = jax.random.normal(k6, (2, 4, 40, 40), dtype=jnp.float32)
    loss4 = jax.block_until_ready(combined_loss(x4, t4, tile_rows=16))
    ref4 = combined_loss_ref(x4, t4)
    assert jnp.allclose(loss4, ref4, rtol=1e-5, atol=1e-5), (loss4, ref4)

    print("KERNEL_OK")
</pallas_src>

<mosaic_0001>
module attributes {stable_mosaic.version = 11 : i64} {
  func.func @_combined_loss_kernel(%arg0: i32, %arg1: memref<16x128xf32, #tpu.memory_space<vmem>>, %arg2: memref<16x128xf32, #tpu.memory_space<vmem>>, %arg3: memref<3x8x128xf32, #tpu.memory_space<vmem>>) attributes {dimension_semantics = [#tpu.dimension_semantics<arbitrary>], iteration_bounds = array<i64: 1>, scalar_prefetch = 0 : i64, scratch_operands = 0 : i64, tpu.core_type = #tpu.core_type<tc>, window_params = [{transform_indices = @transform_0, window_bounds = array<i64: 16, 128>}, {transform_indices = @transform_1, window_bounds = array<i64: 16, 128>}, {pipeline_mode = #tpu.pipeline_mode<synchronous>, transform_indices = @transform_2, window_bounds = array<i64: 3, 8, 128>}]} {
    %c0_i32 = arith.constant 0 : i32
    %0 = arith.cmpi eq, %arg0, %c0_i32 : i32
    %1 = arith.extui %0 : i1 to i32
    %c0_i32_0 = arith.constant 0 : i32
    %2 = arith.cmpi ne, %1, %c0_i32_0 : i32
    scf.if %2 {
      %cst_25 = arith.constant 0.000000e+00 : f32
      %39 = vector.broadcast %cst_25 : f32 to vector<3x8x128xf32>
      %c0_26 = arith.constant 0 : index
      %c0_27 = arith.constant 0 : index
      %c0_28 = arith.constant 0 : index
      %40 = vector.load %arg3[%c0_26, %c0_27, %c0_28] : memref<3x8x128xf32, #tpu.memory_space<vmem>>, vector<3x8x128xf32>
      tpu.vector_store %arg3[%c0_26, %c0_27, %c0_28], %39 {strides = array<i32>} : memref<3x8x128xf32, #tpu.memory_space<vmem>>, vector<3x8x128xf32>,
    } else {
    }
    %c0 = arith.constant 0 : index
    %c0_1 = arith.constant 0 : index
    %3 = vector.load %arg1[%c0, %c0_1] : memref<16x128xf32, #tpu.memory_space<vmem>>, vector<16x128xf32>
    %c0_2 = arith.constant 0 : index
    %c0_3 = arith.constant 0 : index
    %4 = vector.load %arg2[%c0_2, %c0_3] : memref<16x128xf32, #tpu.memory_space<vmem>>, vector<16x128xf32>
    %5 = arith.subf %3, %4 : vector<16x128xf32>
    %6 = arith.mulf %5, %5 : vector<16x128xf32>
    %7 = math.absf %5 : vector<16x128xf32>
    %cst = arith.constant 1.000000e+00 : f32
    %8 = vector.broadcast %cst : f32 to vector<16x128xf32>
    %9 = arith.cmpf olt, %7, %8 : vector<16x128xf32>
    %cst_4 = arith.constant 5.000000e-01 : f32
    %10 = vector.broadcast %cst_4 : f32 to vector<16x128xf32>
    %11 = arith.mulf %10, %6 : vector<16x128xf32>
    %cst_5 = arith.constant 5.000000e-01 : f32
    %12 = vector.broadcast %cst_5 : f32 to vector<16x128xf32>
    %13 = arith.subf %7, %12 : vector<16x128xf32>
    %14 = arith.select %9, %11, %13 : vector<16x128xi1>, vector<16x128xf32>
    %15 = vector.shape_cast %6 : vector<16x128xf32> to vector<2x8x128xf32>
    %cst_6 = arith.constant dense<0.000000e+00> : vector<8x128xf32>
    %16 = vector.multi_reduction <add>, %15, %cst_6 [0] : vector<2x8x128xf32> to vector<8x128xf32>
    %17 = vector.shape_cast %7 : vector<16x128xf32> to vector<2x8x128xf32>
    %cst_7 = arith.constant dense<0.000000e+00> : vector<8x128xf32>
    %18 = vector.multi_reduction <add>, %17, %cst_7 [0] : vector<2x8x128xf32> to vector<8x128xf32>
    %19 = vector.shape_cast %14 : vector<16x128xf32> to vector<2x8x128xf32>
    %cst_8 = arith.constant dense<0.000000e+00> : vector<8x128xf32>
    %20 = vector.multi_reduction <add>, %19, %cst_8 [0] : vector<2x8x128xf32> to vector<8x128xf32>
    %c0_9 = arith.constant 0 : index
    %c0_10 = arith.constant 0 : index
    %c0_11 = arith.constant 0 : index
    %21 = vector.load %arg3[%c0_9, %c0_10, %c0_11] : memref<3x8x128xf32, #tpu.memory_space<vmem>>, vector<1x8x128xf32>
    %22 = vector.shape_cast %21 : vector<1x8x128xf32> to vector<8x128xf32>
    %23 = arith.addf %22, %16 : vector<8x128xf32>
    %c0_12 = arith.constant 0 : index
    %c0_13 = arith.constant 0 : index
    %c0_14 = arith.constant 0 : index
    %24 = vector.load %arg3[%c0_12, %c0_13, %c0_14] : memref<3x8x128xf32, #tpu.memory_space<vmem>>, vector<1x8x128xf32>
    %25 = vector.shape_cast %24 : vector<1x8x128xf32> to vector<8x128xf32>
    %26 = vector.shape_cast %23 : vector<8x128xf32> to vector<1x8x128xf32>
    tpu.vector_store %arg3[%c0_12, %c0_13, %c0_14], %26 {strides = array<i32>} : memref<3x8x128xf32, #tpu.memory_space<vmem>>, vector<1x8x128xf32>,
    %c1 = arith.constant 1 : index
    %c0_15 = arith.constant 0 : index
    %c0_16 = arith.constant 0 : index
    %27 = vector.load %arg3[%c1, %c0_15, %c0_16] : memref<3x8x128xf32, #tpu.memory_space<vmem>>, vector<1x8x128xf32>
    %28 = vector.shape_cast %27 : vector<1x8x128xf32> to vector<8x128xf32>
    %29 = arith.addf %28, %18 : vector<8x128xf32>
    %c1_17 = arith.constant 1 : index
    %c0_18 = arith.constant 0 : index
    %c0_19 = arith.constant 0 : index
    %30 = vector.load %arg3[%c1_17, %c0_18, %c0_19] : memref<3x8x128xf32, #tpu.memory_space<vmem>>, vector<1x8x128xf32>
    %31 = vector.shape_cast %30 : vector<1x8x128xf32> to vector<8x128xf32>
    %32 = vector.shape_cast %29 : vector<8x128xf32> to vector<1x8x128xf32>
    tpu.vector_store %arg3[%c1_17, %c0_18, %c0_19], %32 {strides = array<i32>} : memref<3x8x128xf32, #tpu.memory_space<vmem>>, vector<1x8x128xf32>,
    %c2 = arith.constant 2 : index
    %c0_20 = arith.constant 0 : index
    %c0_21 = arith.constant 0 : index
    %33 = vector.load %arg3[%c2, %c0_20, %c0_21] : memref<3x8x128xf32, #tpu.memory_space<vmem>>, vector<1x8x128xf32>
    %34 = vector.shape_cast %33 : vector<1x8x128xf32> to vector<8x128xf32>
    %35 = arith.addf %34, %20 : vector<8x128xf32>
    %c2_22 = arith.constant 2 : index
    %c0_23 = arith.constant 0 : index
    %c0_24 = arith.constant 0 : index
    %36 = vector.load %arg3[%c2_22, %c0_23, %c0_24] : memref<3x8x128xf32, #tpu.memory_space<vmem>>, vector<1x8x128xf32>
    %37 = vector.shape_cast %36 : vector<1x8x128xf32> to vector<8x128xf32>
    %38 = vector.shape_cast %35 : vector<8x128xf32> to vector<1x8x128xf32>
    tpu.vector_store %arg3[%c2_22, %c0_23, %c0_24], %38 {strides = array<i32>} : memref<3x8x128xf32, #tpu.memory_space<vmem>>, vector<1x8x128xf32>,
    return
  }
  func.func @transform_0(%arg0: i32) -> (i32, i32) {
    %c0_i32 = arith.constant 0 : i32
    %c0_i32_0 = arith.constant 0 : i32
    return %arg0, %c0_i32 : i32, i32
  }
  func.func @transform_1(%arg0: i32) -> (i32, i32) {
    %c0_i32 = arith.constant 0 : i32
    %c0_i32_0 = arith.constant 0 : i32
    return %arg0, %c0_i32 : i32, i32
  }
  func.func @transform_2(%arg0: i32) -> (i32, i32, i32) {
    %c0_i32 = arith.constant 0 : i32
    %c0_i32_0 = arith.constant 0 : i32
    %c0_i32_1 = arith.constant 0 : i32
    %c0_i32_2 = arith.constant 0 : i32
    return %c0_i32, %c0_i32_0, %c0_i32_1 : i32, i32, i32
  }
}

</mosaic_0001>

<llo_original>
// kernel: tpu_custom_call.1
$region0: #{tpu_custom_call.1}
  #allocation0 [shape = 'u32[]', space=smem, size = 0x4, offset = 0x4, fixed_abs, tag = 'smem constant byte address 0x4 - core index']
  #allocation1 [shape = 'u32[72,128]{1,0:T(1,128)}', space=vmem, size = 0x9000, scoped, tag = 'internal scratch']
  %s0 = inlined_call_operand.hbm [shape: f32[16,128], index: 0, kind: input, shape index: {}]
  %s1 = inlined_call_operand.hbm [shape: f32[16,128], index: 1, kind: input, shape index: {}]
  %s2 = inlined_call_operand.hbm [shape: f32[3,8,128], index: 2, kind: output, shape index: {}]
  %s3 = sld [smem:[#allocation0]]
  $region30: #{tpu_custom_call.1} parent=0
    _
  %s5 = ssub.s32 1, %s3
  %s6 = scalar_select 0, %s5, %s3
  $region1: #{tpu_custom_call.1} parent=0
    #allocation2 [shape = 'u8[8192]{0}', space=vmem, size = 0x2000, scoped, tag = 'input window, operand 0, single buffered']
    #allocation3 [shape = 's32[1]{0}', space=sflag, size = 0x4, scoped, tag = 'scoped memory for tpu_custom_call.1']
    #allocation4 [shape = 's32[1]{0}', space=sflag, size = 0x4, scoped, tag = 'scoped memory for tpu_custom_call.1']
    #allocation5 [shape = 'u8[8192]{0}', space=vmem, size = 0x2000, scoped, tag = 'input window, operand 1, single buffered']
    #allocation6 [shape = 's32[1]{0}', space=sflag, size = 0x4, scoped, tag = 'scoped memory for tpu_custom_call.1']
    #allocation7 [shape = 'u8[12288]{0}', space=vmem, size = 0x3000, scoped, tag = 'output window, operand 0, single buffered']
    %7 = vsyncpa [#allocation3], 0
    %8 = vsyncpa [#allocation6], 0
    %9 = vsyncpa [#allocation4], 0
    // Predicated region
    $region2: #{tpu_custom_call.1} parent=1 // pred_check
      _
    $region3: #{tpu_custom_call.1} parent=1 // pred_check_branch
      %11 = sbr.rel (0) target = $region5
    $region4: #{tpu_custom_call.1} parent=1 // pred_region
      %13 = vsyncadd [#allocation3], 0
      %s14 = sshll.u32 %s0, 4
      %s15 = int_to_ptr.hbm [resolvable:$true] %s14
      %s16 = sshll.u32 [#allocation2], 4
      %s17 = int_to_ptr.vmem [resolvable:$true] %s16
      %22 = dma.hbm_to_vmem [thread:$0]  %s15, 256, %s17, [#allocation3], 128, 128, 8
    $region5: #{tpu_custom_call.1} parent=1 // pred_fallthru
      _
    // Predicated region
    $region6: #{tpu_custom_call.1} parent=1 // pred_check
      _
    $region7: #{tpu_custom_call.1} parent=1 // pred_check_branch
      %24 = sbr.rel (0) target = $region9
    $region8: #{tpu_custom_call.1} parent=1 // pred_region
      %26 = vsyncadd [#allocation6], 0
      %s27 = sshll.u32 %s1, 4
      %s28 = int_to_ptr.hbm [resolvable:$true] %s27
      %s29 = sshll.u32 [#allocation5], 4
      %s30 = int_to_ptr.vmem [resolvable:$true] %s29
      %35 = dma.hbm_to_vmem [thread:$0]  %s28, 256, %s30, [#allocation6], 128, 128, 8
    $region9: #{tpu_custom_call.1} parent=1 // pred_fallthru
      _
    // Predicated region
    $region10: #{tpu_custom_call.1} parent=1 // pred_check
      _
    $region11: #{tpu_custom_call.1} parent=1 // pred_check_branch
      %37 = sbr.rel (0) target = $region13
    $region12: #{tpu_custom_call.1} parent=1 // pred_region
      %39 = dma.done [#allocation3], 256
    $region13: #{tpu_custom_call.1} parent=1 // pred_fallthru
      _
    // Predicated region
    $region14: #{tpu_custom_call.1} parent=1 // pred_check
      _
    $region15: #{tpu_custom_call.1} parent=1 // pred_check_branch
      %41 = sbr.rel (0) target = $region17
    $region16: #{tpu_custom_call.1} parent=1 // pred_region
      %43 = dma.done [#allocation6], 256
    $region17: #{tpu_custom_call.1} parent=1 // pred_fallthru
      _
    %p44 = scmp.eq.s32.totalorder 0, 0
    // Predicated region
    $region18: #{tpu_custom_call.1} parent=1 // pred_check
      %p45 = pneg %p44
    $region19: #{tpu_custom_call.1} parent=1 // pred_check_branch
      %47 = sbr.rel (%p45) target = $region21
    $region20: #{tpu_custom_call.1} parent=1 // pred_region
      %48 = vst [vmem:[#allocation7] sm:$0xff] 0.0
      %49 = vst [vmem:[#allocation7 + $0x8] sm:$0xff] 0.0
      %50 = vst [vmem:[#allocation7 + $0x10] sm:$0xff] 0.0
    $region21: #{tpu_custom_call.1} parent=1 // pred_fallthru
      _
    %v51 = vld [vmem:[#allocation2] sm:$0xff]
    %v52 = vld [vmem:[#allocation2 + $0x8] sm:$0xff]
    %v53 = vld [vmem:[#allocation5] sm:$0xff]
    %v54 = vld [vmem:[#allocation5 + $0x8] sm:$0xff]
    %v55 = vsub.f32 %v51, %v53
    %v56 = vsub.f32 %v52, %v54
    %v57 = vmul.f32 %v55, %v55
    %v58 = vmul.f32 %v56, %v56
    %v59 = vand.u32 2147483647, %v55
    %v60 = vand.u32 2147483647, %v56
    %vm61 = vcmp.lt.f32.partialorder %v59, 1.0
    %vm62 = vcmp.lt.f32.partialorder %v60, 1.0
    %v63 = vmul.f32 %v57, 0.5
    %v64 = vmul.f32 %v58, 0.5
    %v65 = vsub.f32 %v59, 0.5
    %v66 = vsub.f32 %v60, 0.5
    %v67 = vsel %vm61, %v63, %v65
    %v68 = vsel %vm62, %v64, %v66
    %v69 = vadd.f32 %v57, %v58
    %v70 = vadd.f32 %v59, %v60
    %v71 = vadd.f32 %v67, %v68
    %v72 = vld [vmem:[#allocation7] sm:$0xff]
    %v73 = vadd.f32 %v72, %v69
    %74 = vst [vmem:[#allocation7] sm:$0xff] %v73
    %s75 = scalar_lea.vmem [#allocation7], 8
    %v76 = vld [vmem:[%s75] sm:$0xff]
    %v77 = vadd.f32 %v76, %v70
    %78 = vst [vmem:[%s75] sm:$0xff] %v77
    %s79 = scalar_lea.vmem [#allocation7], 16
    %v80 = vld [vmem:[%s79] sm:$0xff]
    %v81 = vadd.f32 %v80, %v71
    %82 = vst [vmem:[%s79] sm:$0xff] %v81
    // Predicated region
    $region22: #{tpu_custom_call.1} parent=1 // pred_check
      _
    $region23: #{tpu_custom_call.1} parent=1 // pred_check_branch
      %84 = sbr.rel (0) target = $region25
    $region24: #{tpu_custom_call.1} parent=1 // pred_region
      %86 = vsyncadd [#allocation4], 0
      %s87 = sshll.u32 [#allocation7], 4
      %s88 = int_to_ptr.vmem [resolvable:$true] %s87
      %s89 = sshll.u32 %s2, 4
      %s90 = int_to_ptr.hbm [resolvable:$true] %s89
      %95 = dma.vmem_to_hbm [thread:$0]  %s88, 384, %s90, [#allocation4], 128, 128, 8
    $region25: #{tpu_custom_call.1} parent=1 // pred_fallthru
      _
    // Predicated region
    $region26: #{tpu_custom_call.1} parent=1 // pred_check
      _
    $region27: #{tpu_custom_call.1} parent=1 // pred_check_branch
      %97 = sbr.rel (0) target = $region29
    $region28: #{tpu_custom_call.1} parent=1 // pred_region
      %99 = dma.done [#allocation4], 384
    $region29: #{tpu_custom_call.1} parent=1 // pred_fallthru
      _
    %100 = vsyncpa [#allocation3], 1
    %101 = vsyncpa [#allocation6], 1
    %102 = vsyncpa [#allocation4], 1

</llo_original>
